<compile_context>
chip_gen: v6e
topology: v6e:2x2x1
jax: 0.10.0
libtpu: 0.0.40
codegen_flags: <defaults>
</compile_context>

<pallas_src>
import functools

import jax
import jax.numpy as jnp
from jax import lax
from jax.experimental import pallas as pl
from jax.experimental.pallas import tpu as pltpu


def _round_up(a, b):
    return (a + b - 1) // b * b


def _cdiv(a, b):
    return (a + b - 1) // b


def _output_projection_kernel(x_ref, g_ref, beta_ref, w_ref, bias_ref, o_ref,
                              xn_ref, acc_ref, *, d_out, pp, eps, nk, tk):
    """One (TM, C) token tile x one K-chunk of the projection weight.

    grid = (token_tiles, nk): k (last axis, "arbitrary") streams the weight's K chunks.
    LayerNorm runs once per token tile (k == 0), the matmul accumulates into an f32 VMEM
    scratch, and the grouped channel softmax + bf16 store run at k == nk - 1.
    """
    k = pl.program_id(1)

    # --- k == 0: LayerNorm over the embedding axis (f32 statistics) ----------------------
    @pl.when(k == 0)
    def _():
        x = x_ref[...].astype(jnp.float32)                   # (TM, C)
        mean = jnp.mean(x, axis=-1, keepdims=True)
        xc = x - mean
        var = jnp.mean(xc * xc, axis=-1, keepdims=True)
        xn = xc * lax.rsqrt(var + eps) * g_ref[...].astype(jnp.float32) \
            + beta_ref[...].astype(jnp.float32)
        xn = xn.astype(xn_ref.dtype)                          # bf16 only for the MXU operand
        for kk in range(nk):                                  # static unroll, aligned slices
            xn_ref[kk] = xn[:, kk * tk:(kk + 1) * tk]
        # Fold the bias add into the accumulator init (one fewer full-width f32 temp later).
        acc_ref[...] = jnp.broadcast_to(bias_ref[...].astype(jnp.float32), acc_ref.shape)

    # --- every k: one K-chunk of the projection on the MXU (bf16 in, f32 accumulate) -----
    acc_ref[...] += jnp.dot(xn_ref[k], w_ref[...], preferred_element_type=jnp.float32)

    # --- k == last: per-pixel softmax over the D channel groups + bf16 store -------------
    @pl.when(k == nk - 1)
    def _():
        y = acc_ref[...]                                      # (TM, OUT_pad), bias included
        out_w = y.shape[-1]
        out_valid = d_out * pp                                # column layout is [d, ph, pw]
        if (d_out & (d_out - 1)) == 0 and out_w == out_valid:
            # log2(D) rotate-reduce on the XLU (co-issues with VALU work): stays full width,
            # no concatenate temporaries, no serial D-long slice chain.
            m = y
            shift = pp
            while shift < out_valid:
                m = jnp.maximum(m, pltpu.roll(m, shift, axis=1))
                shift *= 2
            e = jnp.exp(y - m)
            s = e
            shift = pp
            while shift < out_valid:
                s = s + pltpu.roll(s, shift, axis=1)
                shift *= 2
            # approx reciprocal (EUP slot, ~free): rows sum to 1 only to ~1e-3.
            o_ref[...] = (e * pl.reciprocal(s, approx=True)).astype(o_ref.dtype)
        else:
            # Fallback: non-power-of-two D and/or lane-padded OUT -> slice reduction.
            yv = y[:, :out_valid]
            m = yv[:, 0:pp]
            for d in range(1, d_out):
                m = jnp.maximum(m, yv[:, d * pp:(d + 1) * pp])
            e = jnp.exp(yv - jnp.concatenate([m] * d_out, axis=-1))
            s = e[:, 0:pp]
            for d in range(1, d_out):
                s = s + e[:, d * pp:(d + 1) * pp]
            res = e * jnp.concatenate([pl.reciprocal(s, approx=True)] * d_out, axis=-1)
            if out_w != out_valid:                            # zero the lane padding
                res = jnp.concatenate(
                    [res, jnp.zeros((res.shape[0], out_w - out_valid), res.dtype)], axis=-1)
            o_ref[...] = res.astype(o_ref.dtype)


def _choose_k_tile(C, OUT_pad, max_chunk_bytes):
    """Largest K-chunk (multiple of 128, dividing C) whose bf16 weight slab fits the budget."""
    if C * OUT_pad * 2 <= max_chunk_bytes or C % 128 != 0:
        return C                                              # keep the whole weight resident
    best = 128                                                # 128 divides C here
    for tk in range(128, C, 128):
        if C % tk == 0 and tk * OUT_pad * 2 <= max_chunk_bytes:
            best = tk
    return best


def output_projection_forward(x, gamma, beta, w, bias, *,
                              image_size, patch_size, output_dims,
                              eps=1e-5, tm=512,
                              max_weight_chunk_bytes=8 << 20,
                              out_dtype=jnp.float32):
    """x: (B, T, C) with T = (image_size // patch_size)**2  ->  (B, D, H, W) `out_dtype`."""
    B, T, C = x.shape
    P = patch_size
    D = output_dims
    PP = P * P
    OUT = D * PP
    nb = image_size // P
    assert T == nb * nb, "T must equal (image_size // patch_size)**2"

    OUT_pad = _round_up(OUT, 128)         # lane-dense (unmasked) output stores
    N = B * T

    # Generation-aware VMEM budget (v5e/v6e: 128 MiB, v7x: 64 MiB per TensorCore).
    try:
        vmem_cap = int(pltpu.get_tpu_info().vmem_capacity_bytes)
    except Exception:                      # conservative default = v7x per-core VMEM
        vmem_cap = 64 << 20
    vmem_budget = max(32 << 20, int(0.85 * vmem_cap))

    # Token tile: multiple of 16 (bf16 sublane packing) and capped so the "parallel" token
    # axis has >= 2 grid steps whenever possible (keeps both v7x TensorCores busy).
    tm_eff = _round_up(min(tm, max(16, _round_up(_cdiv(N, 2), 16))), 16)

    # K-tiling of the (C, OUT) weight so realistic C/OUT stay inside the VMEM budget.
    tk = _choose_k_tile(C, OUT_pad, max_weight_chunk_bytes)
    nk = C // tk

    def vmem_estimate(tme):
        return (2 * tme * C * x.dtype.itemsize     # x tile, double-buffered
                + tme * C * 2                      # normalized-x scratch (bf16)
                + tme * OUT_pad * 4                # f32 accumulator scratch
                + 2 * tk * OUT_pad * 2             # weight K-chunk, double-buffered
                + 2 * tme * OUT_pad * 2            # bf16 output tile, double-buffered
                + 4 * tme * OUT_pad * 4            # softmax epilogue f32 temporaries
                + 8 * C * 4 + 4 * OUT_pad * 4)     # gamma/beta/bias buffers

    while tm_eff > 16 and vmem_estimate(tm_eff) > int(0.7 * vmem_budget):
        tm_eff = max(16, _round_up(tm_eff // 2, 16))

    N_pad = _round_up(N, tm_eff)
    grid_m = N_pad // tm_eff
    vmem_limit = int(min(vmem_budget, max(32 << 20, 2 * vmem_estimate(tm_eff))))

    # Inputs stay in their native dtype (no wrapper-side bf16 copy of x): LayerNorm stats
    # are computed in f32 in-kernel and only the MXU operand is cast to bf16 there.
    x2d = x.reshape(N, C)
    if N_pad != N:
        x2d = jnp.pad(x2d, ((0, N_pad - N), (0, 0)))
    gamma2d = gamma.reshape(1, C).astype(jnp.float32)
    beta2d = beta.reshape(1, C).astype(jnp.float32)
    w_p = w.astype(jnp.bfloat16)                              # MXU-rate weights
    bias_p = bias.reshape(1, OUT).astype(jnp.float32)
    if OUT_pad != OUT:
        w_p = jnp.pad(w_p, ((0, 0), (0, OUT_pad - OUT)))
        bias_p = jnp.pad(bias_p, ((0, 0), (0, OUT_pad - OUT)))

    kernel = functools.partial(_output_projection_kernel,
                               d_out=D, pp=PP, eps=eps, nk=nk, tk=tk)

    y2d = pl.pallas_call(
        kernel,
        out_shape=jax.ShapeDtypeStruct((N_pad, OUT_pad), jnp.bfloat16),   # bf16 writeback
        grid_spec=pltpu.PrefetchScalarGridSpec(
            num_scalar_prefetch=0,
            grid=(grid_m, nk),                               # reduction (K) axis last
            in_specs=[
                pl.BlockSpec((tm_eff, C), lambda i, k: (i, 0)),     # x (constant over k)
                pl.BlockSpec((1, C), lambda i, k: (0, 0)),          # LN gamma
                pl.BlockSpec((1, C), lambda i, k: (0, 0)),          # LN beta
                pl.BlockSpec((tk, OUT_pad), lambda i, k: (k, 0)),   # weight K-chunk
                pl.BlockSpec((1, OUT_pad), lambda i, k: (0, 0)),    # bias
            ],
            out_specs=pl.BlockSpec((tm_eff, OUT_pad), lambda i, k: (i, 0)),
            scratch_shapes=[
                pltpu.VMEM((nk, tm_eff, tk), jnp.bfloat16),   # LayerNorm output (MXU lhs)
                pltpu.VMEM((tm_eff, OUT_pad), jnp.float32),   # projection accumulator
            ]),
        compiler_params=pltpu.CompilerParams(
            dimension_semantics=("parallel", "arbitrary"),
            vmem_limit_bytes=vmem_limit),
    )(x2d, gamma2d, beta2d, w_p, bias_p)

    # --- Fold (B, T, D*P*P) -> (B, D, H, W): pure rearrangement, kept in bf16 ------------
    # TODO(synk): fuse the fold into out_specs (grid over (B, patch-row)) to remove this
    # extra HBM pass over the output tensor.
    y2d = y2d[:N, :OUT]
    yf = y2d.reshape(B, nb, nb, D, P, P)
    yf = jnp.transpose(yf, (0, 3, 1, 4, 2, 5))               # (B, D, th, ph, tw, pw)
    return yf.reshape(B, D, image_size, image_size).astype(out_dtype)


def _reference_forward(x, gamma, beta, w, bias, *, image_size, patch_size, output_dims,
                       eps=1e-5):
    """Pure-JAX f32 reference mirroring the PyTorch module (fold, then softmax over dim=1)."""
    B, T, C = x.shape
    P = patch_size
    D = output_dims
    nb = image_size // P
    mean = jnp.mean(x, axis=-1, keepdims=True)
    var = jnp.mean((x - mean) ** 2, axis=-1, keepdims=True)
    xn = (x - mean) / jnp.sqrt(var + eps) * gamma + beta
    y = xn @ w + bias                                         # (B, T, D*P*P), layout [d,ph,pw]
    y = y.reshape(B, nb, nb, D, P, P)
    y = jnp.transpose(y, (0, 3, 1, 4, 2, 5)).reshape(B, D, image_size, image_size)
    m = jnp.max(y, axis=1, keepdims=True)
    e = jnp.exp(y - m)
    return e / jnp.sum(e, axis=1, keepdims=True)


if __name__ == "__main__":
    def run_case(key, *, B, image_size, patch_size, embed_size, output_dims,
                 tm, max_weight_chunk_bytes):
        T = (image_size // patch_size) ** 2
        OUT = patch_size * patch_size * output_dims
        kx, kw = jax.random.split(key)
        # Parameter init mirroring the PyTorch module: LN gamma=1/beta=0, xavier W, zero bias.
        gamma = jnp.ones((embed_size,), jnp.float32)
        beta = jnp.zeros((embed_size,), jnp.float32)
        xavier_std = (2.0 / (embed_size + OUT)) ** 0.5
        w = jax.random.normal(kw, (embed_size, OUT), jnp.float32) * xavier_std
        bias = jnp.zeros((OUT,), jnp.float32)
        x = jax.random.normal(kx, (B, T, embed_size), jnp.float32)

        fwd = jax.jit(functools.partial(
            output_projection_forward,
            image_size=image_size, patch_size=patch_size, output_dims=output_dims,
            tm=tm, max_weight_chunk_bytes=max_weight_chunk_bytes))
        out = jax.block_until_ready(fwd(x, gamma, beta, w, bias))
        ref = _reference_forward(x, gamma, beta, w, bias,
                                 image_size=image_size, patch_size=patch_size,
                                 output_dims=output_dims)
        assert out.shape == ref.shape == (B, output_dims, image_size, image_size)
        assert bool(jnp.all(jnp.isfinite(out)))
        # bf16 MXU inputs / bf16 output / approx reciprocal -> loosened tolerance vs f32 ref.
        err = float(jnp.max(jnp.abs(out - ref)))
        assert jnp.allclose(out, ref, atol=2e-2, rtol=2e-2), f"mismatch vs reference: {err}"
        assert jnp.allclose(jnp.sum(out, axis=1), 1.0, atol=1e-2)

    k1, k2, k3 = jax.random.split(jax.random.PRNGKey(0), 3)
    # (1) power-of-two D, lane-aligned OUT -> roll-tree softmax; token axis split in two.
    run_case(k1, B=2, image_size=16, patch_size=4, embed_size=32, output_dims=8,
             tm=512, max_weight_chunk_bytes=8 << 20)
    # (2) multi-step token grid with row padding (B*T = 48 is not a multiple of tm=32).
    run_case(k2, B=3, image_size=16, patch_size=4, embed_size=32, output_dims=8,
             tm=32, max_weight_chunk_bytes=8 << 20)
    # (3) K-tiled weight (C=256 -> two 128-row chunks) + non-power-of-two D with lane-padded
    #     OUT (exercises the slice-path softmax fallback).
    run_case(k3, B=2, image_size=16, patch_size=4, embed_size=256, output_dims=5,
             tm=128, max_weight_chunk_bytes=40_000)

    print("KERNEL_OK")
</pallas_src>

<mosaic_0001>
module attributes {stable_mosaic.version = 11 : i64} {
  func.func @_output_projection_kernel(%arg0: i32, %arg1: i32, %arg2: memref<16x32xf32, #tpu.memory_space<vmem>>, %arg3: memref<1x32xf32, #tpu.memory_space<vmem>>, %arg4: memref<1x32xf32, #tpu.memory_space<vmem>>, %arg5: memref<32x128xbf16, #tpu.memory_space<vmem>>, %arg6: memref<1x128xf32, #tpu.memory_space<vmem>>, %arg7: memref<16x128xbf16, #tpu.memory_space<vmem>>, %arg8: memref<1x16x32xbf16, #tpu.memory_space<vmem>>, %arg9: memref<16x128xf32, #tpu.memory_space<vmem>>) attributes {dimension_semantics = [#tpu.dimension_semantics<parallel>, #tpu.dimension_semantics<arbitrary>], iteration_bounds = array<i64: 2, 1>, scalar_prefetch = 0 : i64, scratch_operands = 2 : i64, tpu.core_type = #tpu.core_type<tc>, window_params = [{transform_indices = @transform_0, window_bounds = array<i64: 16, 32>}, {pipeline_mode = #tpu.pipeline_mode<synchronous>, transform_indices = @transform_1, window_bounds = array<i64: 1, 32>}, {pipeline_mode = #tpu.pipeline_mode<synchronous>, transform_indices = @transform_2, window_bounds = array<i64: 1, 32>}, {transform_indices = @transform_3, window_bounds = array<i64: 32, 128>}, {pipeline_mode = #tpu.pipeline_mode<synchronous>, transform_indices = @transform_4, window_bounds = array<i64: 1, 128>}, {transform_indices = @transform_5, window_bounds = array<i64: 16, 128>}]} {
    %c0_i32 = arith.constant 0 : i32
    %0 = arith.cmpi eq, %arg1, %c0_i32 : i32
    %1 = arith.extui %0 : i1 to i32
    %c0_i32_0 = arith.constant 0 : i32
    %2 = arith.cmpi ne, %1, %c0_i32_0 : i32
    scf.if %2 {
      %c0_10 = arith.constant 0 : index
      %c0_11 = arith.constant 0 : index
      %14 = vector.load %arg2[%c0_10, %c0_11] : memref<16x32xf32, #tpu.memory_space<vmem>>, vector<16x32xf32>
      %cst_12 = arith.constant dense<0.000000e+00> : vector<16xf32>
      %15 = vector.multi_reduction <add>, %14, %cst_12 [1] : vector<16x32xf32> to vector<16xf32>
      %16 = vector.shape_cast %15 : vector<16xf32> to vector<16x1xf32>
      %cst_13 = arith.constant 3.200000e+01 : f32
      %17 = vector.broadcast %cst_13 : f32 to vector<16x1xf32>
      %18 = arith.divf %16, %17 : vector<16x1xf32>
      %19 = vector.broadcast %18 : vector<16x1xf32> to vector<16x32xf32>
      %20 = arith.subf %14, %19 : vector<16x32xf32>
      %21 = arith.mulf %20, %20 : vector<16x32xf32>
      %cst_14 = arith.constant dense<0.000000e+00> : vector<16xf32>
      %22 = vector.multi_reduction <add>, %21, %cst_14 [1] : vector<16x32xf32> to vector<16xf32>
      %23 = vector.shape_cast %22 : vector<16xf32> to vector<16x1xf32>
      %cst_15 = arith.constant 3.200000e+01 : f32
      %24 = vector.broadcast %cst_15 : f32 to vector<16x1xf32>
      %25 = arith.divf %23, %24 : vector<16x1xf32>
      %cst_16 = arith.constant 9.99999974E-6 : f32
      %26 = vector.broadcast %cst_16 : f32 to vector<16x1xf32>
      %27 = arith.addf %25, %26 : vector<16x1xf32>
      %28 = math.rsqrt %27 : vector<16x1xf32>
      %29 = vector.broadcast %28 : vector<16x1xf32> to vector<16x32xf32>
      %30 = arith.mulf %20, %29 : vector<16x32xf32>
      %c0_17 = arith.constant 0 : index
      %c0_18 = arith.constant 0 : index
      %31 = vector.load %arg3[%c0_17, %c0_18] : memref<1x32xf32, #tpu.memory_space<vmem>>, vector<1x32xf32>
      %32 = vector.broadcast %31 : vector<1x32xf32> to vector<16x32xf32>
      %33 = arith.mulf %30, %32 : vector<16x32xf32>
      %c0_19 = arith.constant 0 : index
      %c0_20 = arith.constant 0 : index
      %34 = vector.load %arg4[%c0_19, %c0_20] : memref<1x32xf32, #tpu.memory_space<vmem>>, vector<1x32xf32>
      %35 = vector.broadcast %34 : vector<1x32xf32> to vector<16x32xf32>
      %36 = arith.addf %33, %35 : vector<16x32xf32>
      %37 = arith.truncf %36 : vector<16x32xf32> to vector<16x32xbf16>
      %c0_21 = arith.constant 0 : index
      %c0_22 = arith.constant 0 : index
      %c0_23 = arith.constant 0 : index
      %38 = vector.load %arg8[%c0_21, %c0_22, %c0_23] : memref<1x16x32xbf16, #tpu.memory_space<vmem>>, vector<1x16x32xbf16>
      %39 = vector.shape_cast %38 : vector<1x16x32xbf16> to vector<16x32xbf16>
      %40 = vector.shape_cast %37 : vector<16x32xbf16> to vector<1x16x32xbf16>
      tpu.vector_store %arg8[%c0_21, %c0_22, %c0_23], %40 {strides = array<i32>} : memref<1x16x32xbf16, #tpu.memory_space<vmem>>, vector<1x16x32xbf16>,
      %c0_24 = arith.constant 0 : index
      %c0_25 = arith.constant 0 : index
      %41 = vector.load %arg6[%c0_24, %c0_25] : memref<1x128xf32, #tpu.memory_space<vmem>>, vector<1x128xf32>
      %42 = vector.shape_cast %41 : vector<1x128xf32> to vector<1x128xf32>
      %43 = vector.broadcast %42 : vector<1x128xf32> to vector<16x128xf32>
      %c0_26 = arith.constant 0 : index
      %c0_27 = arith.constant 0 : index
      %44 = vector.load %arg9[%c0_26, %c0_27] : memref<16x128xf32, #tpu.memory_space<vmem>>, vector<16x128xf32>
      tpu.vector_store %arg9[%c0_26, %c0_27], %43 {strides = array<i32>} : memref<16x128xf32, #tpu.memory_space<vmem>>, vector<16x128xf32>,
    } else {
    }
    %c0 = arith.constant 0 : index
    %c0_1 = arith.constant 0 : index
    %3 = vector.load %arg9[%c0, %c0_1] : memref<16x128xf32, #tpu.memory_space<vmem>>, vector<16x128xf32>
    %4 = arith.index_cast %arg1 : i32 to index
    %c0_2 = arith.constant 0 : index
    %c0_3 = arith.constant 0 : index
    %5 = vector.load %arg8[%4, %c0_2, %c0_3] : memref<1x16x32xbf16, #tpu.memory_space<vmem>>, vector<1x16x32xbf16>
    %6 = vector.shape_cast %5 : vector<1x16x32xbf16> to vector<16x32xbf16>
    %c0_4 = arith.constant 0 : index
    %c0_5 = arith.constant 0 : index
    %7 = vector.load %arg5[%c0_4, %c0_5] : memref<32x128xbf16, #tpu.memory_space<vmem>>, vector<32x128xbf16>
    %cst = arith.constant dense<0.000000e+00> : vector<16x128xf32>
    %8 = tpu.matmul %6, %7, %cst {dimension_numbers = #tpu.dot_dimension_numbers<[1], [0], [0], [1], [0, 0, 1, 1], [], []>} : vector<16x32xbf16>, vector<32x128xbf16>, vector<16x128xf32> -> vector<16x128xf32>
    %9 = arith.addf %3, %8 : vector<16x128xf32>
    %c0_6 = arith.constant 0 : index
    %c0_7 = arith.constant 0 : index
    %10 = vector.load %arg9[%c0_6, %c0_7] : memref<16x128xf32, #tpu.memory_space<vmem>>, vector<16x128xf32>
    tpu.vector_store %arg9[%c0_6, %c0_7], %9 {strides = array<i32>} : memref<16x128xf32, #tpu.memory_space<vmem>>, vector<16x128xf32>,
    %c0_i32_8 = arith.constant 0 : i32
    %11 = arith.cmpi eq, %arg1, %c0_i32_8 : i32
    %12 = arith.extui %11 : i1 to i32
    %c0_i32_9 = arith.constant 0 : i32
    %13 = arith.cmpi ne, %12, %c0_i32_9 : i32
    scf.if %13 {
      %c0_10 = arith.constant 0 : index
      %c0_11 = arith.constant 0 : index
      %14 = vector.load %arg9[%c0_10, %c0_11] : memref<16x128xf32, #tpu.memory_space<vmem>>, vector<16x128xf32>
      %c16_i32 = arith.constant 16 : i32
      %15 = tpu.dynamic_rotate %14 by %c16_i32 dim 1 : vector<16x128xf32>, i32 -> vector<16x128xf32>
      %16 = arith.maximumf %14, %15 : vector<16x128xf32>
      %c32_i32 = arith.constant 32 : i32
      %17 = tpu.dynamic_rotate %16 by %c32_i32 dim 1 : vector<16x128xf32>, i32 -> vector<16x128xf32>
      %18 = arith.maximumf %16, %17 : vector<16x128xf32>
      %c64_i32 = arith.constant 64 : i32
      %19 = tpu.dynamic_rotate %18 by %c64_i32 dim 1 : vector<16x128xf32>, i32 -> vector<16x128xf32>
      %20 = arith.maximumf %18, %19 : vector<16x128xf32>
      %21 = arith.subf %14, %20 : vector<16x128xf32>
      %22 = math.exp %21 : vector<16x128xf32>
      %c16_i32_12 = arith.constant 16 : i32
      %23 = tpu.dynamic_rotate %22 by %c16_i32_12 dim 1 : vector<16x128xf32>, i32 -> vector<16x128xf32>
      %24 = arith.addf %22, %23 : vector<16x128xf32>
      %c32_i32_13 = arith.constant 32 : i32
      %25 = tpu.dynamic_rotate %24 by %c32_i32_13 dim 1 : vector<16x128xf32>, i32 -> vector<16x128xf32>
      %26 = arith.addf %24, %25 : vector<16x128xf32>
      %c64_i32_14 = arith.constant 64 : i32
      %27 = tpu.dynamic_rotate %26 by %c64_i32_14 dim 1 : vector<16x128xf32>, i32 -> vector<16x128xf32>
      %28 = arith.addf %26, %27 : vector<16x128xf32>
      %29 = tpu.reciprocal %28 {approx = true} : vector<16x128xf32> -> vector<16x128xf32>
      %30 = arith.mulf %22, %29 : vector<16x128xf32>
      %31 = arith.truncf %30 : vector<16x128xf32> to vector<16x128xbf16>
      %c0_15 = arith.constant 0 : index
      %c0_16 = arith.constant 0 : index
      %32 = vector.load %arg7[%c0_15, %c0_16] : memref<16x128xbf16, #tpu.memory_space<vmem>>, vector<16x128xbf16>
      tpu.vector_store %arg7[%c0_15, %c0_16], %31 {strides = array<i32>} : memref<16x128xbf16, #tpu.memory_space<vmem>>, vector<16x128xbf16>,
    } else {
    }
    return
  }
  func.func @transform_0(%arg0: i32, %arg1: i32) -> (i32, i32) {
    %c0_i32 = arith.constant 0 : i32
    %c0_i32_0 = arith.constant 0 : i32
    return %arg0, %c0_i32 : i32, i32
  }
  func.func @transform_1(%arg0: i32, %arg1: i32) -> (i32, i32) {
    %c0_i32 = arith.constant 0 : i32
    %c0_i32_0 = arith.constant 0 : i32
    %c0_i32_1 = arith.constant 0 : i32
    return %c0_i32, %c0_i32_0 : i32, i32
  }
  func.func @transform_2(%arg0: i32, %arg1: i32) -> (i32, i32) {
    %c0_i32 = arith.constant 0 : i32
    %c0_i32_0 = arith.constant 0 : i32
    %c0_i32_1 = arith.constant 0 : i32
    return %c0_i32, %c0_i32_0 : i32, i32
  }
  func.func @transform_3(%arg0: i32, %arg1: i32) -> (i32, i32) {
    %c0_i32 = arith.constant 0 : i32
    %c0_i32_0 = arith.constant 0 : i32
    return %arg1, %c0_i32 : i32, i32
  }
  func.func @transform_4(%arg0: i32, %arg1: i32) -> (i32, i32) {
    %c0_i32 = arith.constant 0 : i32
    %c0_i32_0 = arith.constant 0 : i32
    %c0_i32_1 = arith.constant 0 : i32
    return %c0_i32, %c0_i32_0 : i32, i32
  }
  func.func @transform_5(%arg0: i32, %arg1: i32) -> (i32, i32) {
    %c0_i32 = arith.constant 0 : i32
    %c0_i32_0 = arith.constant 0 : i32
    return %arg0, %c0_i32 : i32, i32
  }
}

</mosaic_0001>

<llo_original>
// kernel: output_projection_forward.1
$region0: #{output_projection_forward.1}
  #allocation0 [shape = 'u32[]', space=smem, size = 0x4, offset = 0x4, fixed_abs, tag = 'smem constant byte address 0x4 - core index']
  #allocation1 [shape = 'u32[144,128]{1,0:T(1,128)}', space=vmem, size = 0x12000, scoped, tag = 'internal scratch']
  #allocation2 [shape = 'bf16[1,16,32]{2,1,0:T(8,128)(2,1)}', space=vmem, size = 0x1000, scoped, tag = 'scratch operand']
  #allocation3 [shape = 'f32[16,128]{1,0:T(8,128)}', space=vmem, size = 0x2000, scoped, tag = 'scratch operand']
  %s0 = inlined_call_operand.vmem [shape: f32[32,32], index: 0, kind: input, shape index: {}]
  %s1 = inlined_call_operand.vmem [shape: f32[1,32], index: 1, kind: input, shape index: {}]
  %s2 = inlined_call_operand.vmem [shape: f32[1,32], index: 2, kind: input, shape index: {}]
  %s3 = inlined_call_operand.vmem [shape: bf16[32,128], index: 3, kind: input, shape index: {}]
  %s4 = inlined_call_operand.vmem [shape: f32[1,128], index: 4, kind: input, shape index: {}]
  %s5 = inlined_call_operand.vmem [shape: bf16[32,128], index: 5, kind: output, shape index: {}]
  %s6 = sld [smem:[#allocation0]]
  $region61: #{output_projection_forward.1} parent=0
    _
  %s8 = ssub.s32 1, %s6
  %s9 = scalar_select 0, %s8, %s6
  loop: start=0, step=1, limit=4
  $region2: #{output_projection_forward.1} parent=0 // loop_pre_header
    _
  $region3: #{output_projection_forward.1} parent=0 // loop_header
    %s11 = sphi 0, %s15
    %p12 = scmp.ge.s32.totalorder %s11, 4
    %s18 = sphi 0, %s30
    %s19 = sphi 0, %s26
    %s20 = sphi 0, %s18
    %s21 = sphi 0, %s19
    %s22 = sphi 0, %s20
    %s23 = sphi 0, %s21
    %s33 = sphi 0, %s35
    %s36 = sphi 0, %s33
    %s37 = sphi 0, %s36
    %s53 = sphi 0, %s37
    %s57 = sphi 0, %s57
    %s59 = sphi 0, %s57
    %s60 = sphi 0, %s59
    %s74 = sphi 0, %s60
    %s78 = sphi 0, %s78
    %s80 = sphi 0, %s78
    %s81 = sphi 0, %s80
    %s95 = sphi 0, %s81
    %s101 = sphi 0, %s103
    %s104 = sphi 0, %s101
    %s105 = sphi 0, %s104
    %s121 = sphi 0, %s105
    %s125 = sphi 0, %s125
    %s127 = sphi 0, %s125
    %s128 = sphi 0, %s127
    %s142 = sphi 0, %s128
    %s148 = sphi 0, %s150
    %s151 = sphi 0, %s148
    %s152 = sphi 0, %s151
    %s168 = sphi 0, %s152
  $region4: #{output_projection_forward.1} parent=0 // loop_header_branch
    %14 = sbr.rel (%p12) target = $region8
  $region5: #{output_projection_forward.1} parent=0 // loop_body
    %s16 = ssub.s32 %s11, 1
    %s17 = ssub.s32 %s11, 2
    %s24 = sadd.s32 1, %s19
    %p25 = scmp.ge.s32.totalorder %s24, 1
    %s26 = scalar_select %p25, 0, %s24
    %s27 = sadd.s32 1, %s18
    %s28 = scalar_select %p25, %s27, %s18
    %p29 = scmp.ge.s32.totalorder %s28, 2
    %s30 = scalar_select %p29, 0, %s28
    %s31 = ssub.s32 %s18, %s30
    %p32 = scmp.eq.s32.totalorder %s31, 0
    %s34 = sadd.s32 %s33, 1
    %s35 = scalar_select %p32, %s33, %s34
    %p38 = pneg %p32
    %p39 = scmp.eq.s32.totalorder %s11, 1
    %p40 = por %p38, %p39
    %p41 = scmp.ne.s32.totalorder %s33, %s36
    %p42 = scmp.eq.s32.totalorder %s11, 0
    %p43 = por %p41, %p42
    %p44 = scmp.ne.s32.totalorder %s33, %s36
    %p45 = scmp.eq.s32.totalorder %s16, 1
    %p46 = por %p44, %p45
    %p47 = scmp.ne.s32.totalorder %s36, %s37
    %p48 = scmp.eq.s32.totalorder %s16, 0
    %p49 = por %p47, %p48
    %p50 = scmp.ne.s32.totalorder %s36, %s37
    %p51 = scmp.eq.s32.totalorder %s17, 1
    %p52 = por %p50, %p51
    %p54 = scmp.ne.s32.totalorder %s37, %s53
    %p55 = scmp.eq.s32.totalorder %s17, 0
    %p56 = por %p54, %p55
    %s58 = sadd.s32 %s57, 1
    %p61 = scmp.eq.s32.totalorder %s11, 1
    %p62 = scmp.ne.s32.totalorder %s57, %s59
    %p63 = scmp.eq.s32.totalorder %s11, 0
    %p64 = por %p62, %p63
    %p65 = scmp.ne.s32.totalorder %s57, %s59
    %p66 = scmp.eq.s32.totalorder %s16, 1
    %p67 = por %p65, %p66
    %p68 = scmp.ne.s32.totalorder %s59, %s60
    %p69 = scmp.eq.s32.totalorder %s16, 0
    %p70 = por %p68, %p69
    %p71 = scmp.ne.s32.totalorder %s59, %s60
    %p72 = scmp.eq.s32.totalorder %s17, 1
    %p73 = por %p71, %p72
    %p75 = scmp.ne.s32.totalorder %s60, %s74
    %p76 = scmp.eq.s32.totalorder %s17, 0
    %p77 = por %p75, %p76
    %s79 = sadd.s32 %s78, 1
    %p82 = scmp.eq.s32.totalorder %s11, 1
    %p83 = scmp.ne.s32.totalorder %s78, %s80
    %p84 = scmp.eq.s32.totalorder %s11, 0
    %p85 = por %p83, %p84
    %p86 = scmp.ne.s32.totalorder %s78, %s80
    %p87 = scmp.eq.s32.totalorder %s16, 1
    %p88 = por %p86, %p87
    %p89 = scmp.ne.s32.totalorder %s80, %s81
    %p90 = scmp.eq.s32.totalorder %s16, 0
    %p91 = por %p89, %p90
    %p92 = scmp.ne.s32.totalorder %s80, %s81
    %p93 = scmp.eq.s32.totalorder %s17, 1
    %p94 = por %p92, %p93
    %p96 = scmp.ne.s32.totalorder %s81, %s95
    %p97 = scmp.eq.s32.totalorder %s17, 0
    %p98 = por %p96, %p97
    %s99 = ssub.s32 %s19, %s26
    %p100 = scmp.eq.s32.totalorder %s99, 0
    %s102 = sadd.s32 %s101, 1
    %s103 = scalar_select %p100, %s101, %s102
    %p106 = pneg %p100
    %p107 = scmp.eq.s32.totalorder %s11, 1
    %p108 = por %p106, %p107
    %p109 = scmp.ne.s32.totalorder %s101, %s104
    %p110 = scmp.eq.s32.totalorder %s11, 0
    %p111 = por %p109, %p110
    %p112 = scmp.ne.s32.totalorder %s101, %s104
    %p113 = scmp.eq.s32.totalorder %s16, 1
    %p114 = por %p112, %p113
    %p115 = scmp.ne.s32.totalorder %s104, %s105
    %p116 = scmp.eq.s32.totalorder %s16, 0
    %p117 = por %p115, %p116
    %p118 = scmp.ne.s32.totalorder %s104, %s105
    %p119 = scmp.eq.s32.totalorder %s17, 1
    %p120 = por %p118, %p119
    %p122 = scmp.ne.s32.totalorder %s105, %s121
    %p123 = scmp.eq.s32.totalorder %s17, 0
    %p124 = por %p122, %p123
    %s126 = sadd.s32 %s125, 1
    %p129 = scmp.eq.s32.totalorder %s11, 1
    %p130 = scmp.ne.s32.totalorder %s125, %s127
    %p131 = scmp.eq.s32.totalorder %s11, 0
    %p132 = por %p130, %p131
    %p133 = scmp.ne.s32.totalorder %s125, %s127
    %p134 = scmp.eq.s32.totalorder %s16, 1
    %p135 = por %p133, %p134
    %p136 = scmp.ne.s32.totalorder %s127, %s128
    %p137 = scmp.eq.s32.totalorder %s16, 0
    %p138 = por %p136, %p137
    %p139 = scmp.ne.s32.totalorder %s127, %s128
    %p140 = scmp.eq.s32.totalorder %s17, 1
    %p141 = por %p139, %p140
    %p143 = scmp.ne.s32.totalorder %s128, %s142
    %p144 = scmp.eq.s32.totalorder %s17, 0
    %p145 = por %p143, %p144
    %s146 = ssub.s32 %s18, %s30
    %p147 = scmp.eq.s32.totalorder %s146, 0
    %s149 = sadd.s32 %s148, 1
    %s150 = scalar_select %p147, %s148, %s149
    %p153 = pneg %p147
    %p154 = scmp.eq.s32.totalorder %s11, 1
    %p155 = por %p153, %p154
    %p156 = scmp.ne.s32.totalorder %s148, %s151
    %p157 = scmp.eq.s32.totalorder %s11, 0
    %p158 = por %p156, %p157
    %p159 = scmp.ne.s32.totalorder %s148, %s151
    %p160 = scmp.eq.s32.totalorder %s16, 1
    %p161 = por %p159, %p160
    %p162 = scmp.ne.s32.totalorder %s151, %s152
    %p163 = scmp.eq.s32.totalorder %s16, 0
    %p164 = por %p162, %p163
    %p165 = scmp.ne.s32.totalorder %s151, %s152
    %p166 = scmp.eq.s32.totalorder %s17, 1
    %p167 = por %p165, %p166
    %p169 = scmp.ne.s32.totalorder %s152, %s168
    %p170 = scmp.eq.s32.totalorder %s17, 0
    %p171 = por %p169, %p170
    %p172 = scmp.le.s32.totalorder 1, %s11
    %p173 = scmp.lt.s32.totalorder %s11, 3
    %p174 = pnand %p172, %p173
    %p175 = pneg %p174
    // Predicated region
    $region9: #{output_projection_forward.1} parent=5 // pred_check
      _
    $region10: #{output_projection_forward.1} parent=5 // pred_check_branch
      %177 = sbr.rel (%p174) target = $region12
    $region11: #{output_projection_forward.1} parent=5 // pred_region
      %s178 = ssub.s32 %s11, 1
      // Predicated region
      $region13: #{output_projection_forward.1} parent=11 // pred_check
        %p179 = pneg %p70
      $region14: #{output_projection_forward.1} parent=11 // pred_check_branch
        %181 = sbr.rel (%p179) target = $region16
      $region15: #{output_projection_forward.1} parent=11 // pred_region
        _
      $region16: #{output_projection_forward.1} parent=11 // pred_fallthru
        _
      // Predicated region
      $region17: #{output_projection_forward.1} parent=11 // pred_check
        %p182 = pneg %p91
      $region18: #{output_projection_forward.1} parent=11 // pred_check_branch
        %184 = sbr.rel (%p182) target = $region20
      $region19: #{output_projection_forward.1} parent=11 // pred_region
        _
      $region20: #{output_projection_forward.1} parent=11 // pred_fallthru
        _
      // Predicated region
      $region21: #{output_projection_forward.1} parent=11 // pred_check
        %p185 = pneg %p117
      $region22: #{output_projection_forward.1} parent=11 // pred_check_branch
        %187 = sbr.rel (%p185) target = $region24
      $region23: #{output_projection_forward.1} parent=11 // pred_region
        %s188 = smul.u32 4, %s21
        %p189 = scmp.lt.s32.totalorder %s188, 3
        %s190 = scalar_select %p189, %s188, 3
        %s191 = smul.addr %s190, 4
        %s192 = scalar_lea.vmem %s3, %s191
        %s193 = smul.u32 4, %s21
      $region24: #{output_projection_forward.1} parent=11 // pred_fallthru
        _
      // Predicated region
      $region25: #{output_projection_forward.1} parent=11 // pred_check
        %p194 = pneg %p138
      $region26: #{output_projection_forward.1} parent=11 // pred_check_branch
        %196 = sbr.rel (%p194) target = $region28
      $region27: #{output_projection_forward.1} parent=11 // pred_region
        _
      $region28: #{output_projection_forward.1} parent=11 // pred_fallthru
        _
    $region12: #{output_projection_forward.1} parent=5 // pred_fallthru
      _
    %p197 = scmp.lt.s32.totalorder %s11, 2
    // Predicated region
    $region29: #{output_projection_forward.1} parent=5 // pred_check
      %p198 = pneg %p197
    $region30: #{output_projection_forward.1} parent=5 // pred_check_branch
      %200 = sbr.rel (%p198) target = $region32
    $region31: #{output_projection_forward.1} parent=5 // pred_region
      // Predicated region
      $region33: #{output_projection_forward.1} parent=31 // pred_check
        %p201 = pneg %p43
      $region34: #{output_projection_forward.1} parent=31 // pred_check_branch
        %203 = sbr.rel (%p201) target = $region36
      $region35: #{output_projection_forward.1} parent=31 // pred_region
        %s204 = smul.u32 2, %s18
        %p205 = scmp.lt.s32.totalorder %s204, 3
        %s206 = scalar_select %p205, %s204, 3
        %s207 = smul.addr %s206, 8
        %s208 = scalar_lea.vmem %s0, %s207
        %s209 = smul.u32 2, %s18
      $region36: #{output_projection_forward.1} parent=31 // pred_fallthru
        _
    $region32: #{output_projection_forward.1} parent=5 // pred_fallthru
      _
    %p210 = scmp.le.s32.totalorder 1, %s11
    %p211 = scmp.lt.s32.totalorder %s11, 3
    %p212 = pnand %p210, %p211
    %p213 = pneg %p212
    // Predicated region
    $region37: #{output_projection_forward.1} parent=5 // pred_check
      _
    $region38: #{output_projection_forward.1} parent=5 // pred_check_branch
      %215 = sbr.rel (%p212) target = $region40
    $region39: #{output_projection_forward.1} parent=5 // pred_region
      %s216 = ssub.s32 %s11, 1
      %s217 = smul.u32 2, %s20
      %p218 = scmp.lt.s32.totalorder %s217, 3
      %s219 = scalar_select %p218, %s217, 3
      %s220 = smul.addr %s219, 8
      %s221 = scalar_lea.vmem %s0, %s220
      %p222 = pneg %p49
      %p223 = pneg %p46
      %p224 = pneg %p70
      %p225 = pneg %p67
      %p226 = pneg %p91
      %p227 = pneg %p88
      %s228 = smul.u32 4, %s21
      %p229 = scmp.lt.s32.totalorder %s228, 3
      %s230 = scalar_select %p229, %s228, 3
      %s231 = smul.addr %s230, 4
      %s232 = scalar_lea.vmem %s3, %s231
      %p233 = pneg %p117
      %p234 = pneg %p114
      %p235 = pneg %p138
      %p236 = pneg %p135
      %p237 = pneg %p164
      %p238 = pneg %p161
      %s239 = smul.u32 2, %s20
      %p240 = scmp.lt.s32.totalorder %s239, 3
      %s241 = scalar_select %p240, %s239, 3
      %s242 = smul.addr %s241, 4
      %s243 = scalar_lea.vmem %s5, %s242
      %s244 = smul.u32 2, %s20
      %p245 = scmp.lt.s32.totalorder %s244, 3
      %s246 = scalar_select %p245, %s244, 3
      %s247 = smul.addr %s246, 8
      %s248 = scalar_lea.vmem %s0, %s247
      %s249 = smul.u32 2, %s20
      %s250 = smul.u32 4, %s21
      %p251 = scmp.lt.s32.totalorder %s250, 3
      %s252 = scalar_select %p251, %s250, 3
      %s253 = smul.addr %s252, 4
      %s254 = scalar_lea.vmem %s3, %s253
      %s255 = smul.u32 4, %s21
      %s256 = smul.u32 2, %s20
      %p257 = scmp.lt.s32.totalorder %s256, 3
      %s258 = scalar_select %p257, %s256, 3
      %s259 = smul.addr %s258, 4
      %s260 = scalar_lea.vmem %s5, %s259
      %s261 = smul.u32 2, %s20
      %p263 = scmp.eq.s32.totalorder %s21, 0
      // Predicated region
      $region41: #{output_projection_forward.1} parent=39 // pred_check
        %p264 = pneg %p263
      $region42: #{output_projection_forward.1} parent=39 // pred_check_branch
        %266 = sbr.rel (%p264) target = $region44
      $region43: #{output_projection_forward.1} parent=39 // pred_region
        %v267 = vld [vmem:[%s248] sm:$0xff]
        %v268 = vld [vmem:[%s248 + $0x8] sm:$0xff]
        %vm269 = vcmask 261120
        %v270 = vsel %vm269, %v267, 0.0
        %271 = vadd.xlane.f32.xlu0 %v270
        %v272 = vpop.xlane.xlu0 %271
        %v273 = vsel %vm269, %v268, 0.0
        %274 = vadd.xlane.f32.xlu0 %v273
        %v275 = vpop.xlane.xlu0 %274
        %v276 = vrcp.pop 32.0
        %v277 = vmul.f32 %v272, %v276
        %v278 = vmul.f32 %v275, %v276
        %v279 = vsub.f32 %v267, %v277
        %v280 = vsub.f32 %v268, %v278
        %v281 = vmul.f32 %v279, %v279
        %v282 = vmul.f32 %v280, %v280
        %v283 = vsel %vm269, %v281, 0.0
        %284 = vadd.xlane.f32.xlu0 %v283
        %v285 = vpop.xlane.xlu0 %284
        %v286 = vsel %vm269, %v282, 0.0
        %287 = vadd.xlane.f32.xlu0 %v286
        %v288 = vpop.xlane.xlu0 %287
        %v289 = vmul.f32 %v285, %v276
        %v290 = vmul.f32 %v288, %v276
        %v291 = vadd.f32 %v289, 1e-05
        %v292 = vadd.f32 %v290, 1e-05
        %v293 = vrsqrt.pop %v291
        %v294 = vrsqrt.pop %v292
        %v295 = vmul.f32 %v279, %v293
        %v296 = vmul.f32 %v280, %v294
        %v297 = vld [vmem:[%s1] sm:$0x1]
        %v299 = vlaneseq
        %v300 = vshrl.u32 %v299, 7
        %v301 = vsub.s32 0, %v300
        %v302 = vrot.slane %v297, %v301
        %v304 = vmul.f32 %v295, %v302
        %v305 = vmul.f32 %v296, %v302
        %v306 = vld [vmem:[%s2] sm:$0x1]
        %v308 = vlaneseq
        %v309 = vshrl.u32 %v308, 7
        %v310 = vsub.s32 0, %v309
        %v311 = vrot.slane %v306, %v310
        %v313 = vadd.f32 %v304, %v311
        %v314 = vadd.f32 %v305, %v311
        %v315 = vpack.c.bf16 %v314, %v313
        %v317 = vunpack.c.l.b16 %v315
        %v318 = vunpack.c.h.b16 %v315
        %v319 = vpack.c.b16 %v317, %v317
        %v320 = vpack.c.b16 %v318, %v318
        %vm323 = vcmask 257024
        %324 = vst.msk [vmem:[#allocation2] sm:$0xf] %vm323, %v319
        %325 = vst.msk [vmem:[#allocation2 + $0x4] sm:$0xf] %vm323, %v320
        %v326 = vld [vmem:[%s4] sm:$0x1]
        %v328 = vlaneseq
        %v329 = vshrl.u32 %v328, 7
        %v330 = vsub.s32 0, %v329
        %v331 = vrot.slane %v326, %v330
        %333 = vst [vmem:[#allocation3] sm:$0xff] %v331
        %334 = vst [vmem:[#allocation3 + $0x8] sm:$0xff] %v331
      $region44: #{output_projection_forward.1} parent=39 // pred_fallthru
        _
      %v335 = vld [vmem:[#allocation3] sm:$0xff]
      %v336 = vld [vmem:[#allocation3 + $0x8] sm:$0xff]
      %s337 = smul.u32 %s21, 2
      %s338 = smul.addr %s337, 4
      %s339 = scalar_lea.vmem [#allocation2], %s338
      %v340 = vld [vmem:[%s339] sm:$0xf]
      %v341 = vld [vmem:[%s339 + $0x4] sm:$0xf]
      %v342 = vld [vmem:[%s254] sm:$0xf]
      %v343 = vld [vmem:[%s254 + $0x4] sm:$0xf]
      %v344 = vld [vmem:[%s254 + $0x8] sm:$0xf]
      %v345 = vld [vmem:[%s254 + $0xc] sm:$0xf]
      %v348 = vunpack.c.l.b16 %v340
      %v349 = vunpack.c.l.b16 %v341
      %v350 = vpack.c.b16 %v349, %v348
      %v355 = vunpack.c.l.b16 %v342
      %v356 = vunpack.c.l.b16 %v343
      %v357 = vunpack.c.l.b16 %v344
      %v358 = vunpack.c.l.b16 %v345
      %v359 = vpack.c.b16 %v356, %v355
      %v360 = vpack.c.b16 %v358, %v357
      %vm363 = vcmask 261120
      %v365 = vsel %vm363, %v350, 0
      %367 = vmatprep.subr.bf16.mxu0 0
      %368 = vmatpush1.bf16.msra.mxu0 0
      %369 = vmatprep.subr.bf16.mxu0 0
      %370 = vmatpush1.bf16.msra.mxu0 0
      %371 = vmatprep.subr.bf16.mxu0 0
      %372 = vmatpush1.bf16.msra.mxu0 0
      %373 = vmatprep.subr.bf16.mxu0 0
      %374 = vmatpush1.bf16.msra.mxu0 0
      %375 = vmatprep.subr.bf16.mxu0 0
      %376 = vmatpush1.bf16.msra.mxu0 0
      %377 = vmatprep.subr.bf16.mxu0 0
      %378 = vmatpush1.bf16.msra.mxu0 0
      %379 = vmatprep.subr.bf16.mxu0 0
      %380 = vmatpush1.bf16.msra.mxu0 %v360
      %381 = vmatprep.subr.bf16.mxu0 0
      %382 = vmatpush1.bf16.msra.mxu0 %v359
      %383 = vmatprep.subr.bf16.mxu0 0
      %384 = vmatpush2.bf16.msra.mxu0 0
      %385 = vmatprep.subr.bf16.mxu0 0
      %386 = vmatpush2.bf16.msra.mxu0 0
      %387 = vmatprep.subr.bf16.mxu0 0
      %388 = vmatpush2.bf16.msra.mxu0 0
      %389 = vmatprep.subr.bf16.mxu0 0
      %390 = vmatpush2.bf16.msra.mxu0 0
      %391 = vmatprep.subr.bf16.mxu0 0
      %392 = vmatpush2.bf16.msra.mxu0 0
      %393 = vmatprep.subr.bf16.mxu0 0
      %394 = vmatpush2.bf16.msra.mxu0 0
      %395 = vmatprep.subr.bf16.mxu0 0
      %396 = vmatpush2.bf16.msra.mxu0 0
      %397 = vmatprep.subr.bf16.mxu0 0
      %398 = vmatpush2.bf16.msra.mxu0 0
      %399 = vmatprep.mubr.bf16.mxu0 0
      %400 = vmatmul.mubr.bf16.gmra.mxu0 %v365
      %v401 = vpop.f32.mrf.mxu0
      %v402 = vadd.f32 0.0, %v401
      %v403 = vpop.f32.mrf.mxu0
      %v404 = vpop.f32.mrf.mxu0
      %v405 = vadd.f32 0.0, %v404
      %v406 = vpop.f32.mrf.mxu0
      %407 = vdwg.mxu0
      %v408 = vadd.f32 %v335, %v402
      %v409 = vadd.f32 %v336, %v405
      %410 = vst [vmem:[#allocation3] sm:$0xff] %v408
      %411 = vst [vmem:[#allocation3 + $0x8] sm:$0xff] %v409
      // Predicated region
      $region45: #{output_projection_forward.1} parent=39 // pred_check
        %p412 = pneg %p263
      $region46: #{output_projection_forward.1} parent=39 // pred_check_branch
        %414 = sbr.rel (%p412) target = $region48
      $region47: #{output_projection_forward.1} parent=39 // pred_region
        %v415 = vld [vmem:[#allocation3] sm:$0xff]
        %v416 = vld [vmem:[#allocation3 + $0x8] sm:$0xff]
        %417 = vrot.lane.b32.xlu0 %v415, 16
        %v418 = vpop.permute.xlu0 %417
        %419 = vrot.lane.b32.xlu0 %v416, 16
        %v420 = vpop.permute.xlu0 %419
        %v421 = vmax.f32 %v415, %v418
        %v422 = vmax.f32 %v416, %v420
        %423 = vrot.lane.b32.xlu0 %v421, 32
        %v424 = vpop.permute.xlu0 %423
        %425 = vrot.lane.b32.xlu0 %v422, 32
        %v426 = vpop.permute.xlu0 %425
        %v427 = vmax.f32 %v421, %v424
        %v428 = vmax.f32 %v422, %v426
        %429 = vrot.lane.b32.xlu0 %v427, 64
        %v430 = vpop.permute.xlu0 %429
        %431 = vrot.lane.b32.xlu0 %v428, 64
        %v432 = vpop.permute.xlu0 %431
        %v433 = vmax.f32 %v427, %v430
        %v434 = vmax.f32 %v428, %v432
        %v435 = vsub.f32 %v415, %v433
        %v436 = vsub.f32 %v416, %v434
        %v437 = vmul.f32 %v435, 1.442695
        %v438 = vpow.pop %v437
        %v439 = vmul.f32 %v436, 1.442695
        %v440 = vpow.pop %v439
        %441 = vrot.lane.b32.xlu0 %v438, 16
        %v442 = vpop.permute.xlu0 %441
        %443 = vrot.lane.b32.xlu0 %v440, 16
        %v444 = vpop.permute.xlu0 %443
        %v445 = vadd.f32 %v438, %v442
        %v446 = vadd.f32 %v440, %v444
        %447 = vrot.lane.b32.xlu0 %v445, 32
        %v448 = vpop.permute.xlu0 %447
        %449 = vrot.lane.b32.xlu0 %v446, 32
        %v450 = vpop.permute.xlu0 %449
        %v451 = vadd.f32 %v445, %v448
        %v452 = vadd.f32 %v446, %v450
        %453 = vrot.lane.b32.xlu0 %v451, 64
        %v454 = vpop.permute.xlu0 %453
        %455 = vrot.lane.b32.xlu0 %v452, 64
        %v456 = vpop.permute.xlu0 %455
        %v457 = vadd.f32 %v451, %v454
        %v458 = vadd.f32 %v452, %v456
        %v459 = vrcp.pop %v457
        %v460 = vrcp.pop %v458
        %v461 = vmul.f32 %v438, %v459
        %v462 = vmul.f32 %v440, %v460
        %v463 = vpack.c.bf16 %v462, %v461
        %v465 = vunpack.c.l.b16 %v463
        %v466 = vunpack.c.h.b16 %v463
        %v467 = vpack.c.b16 %v465, %v465
        %v468 = vpack.c.b16 %v466, %v466
        %471 = vst [vmem:[%s260] sm:$0xf] %v467
        %472 = vst [vmem:[%s260 + $0x4] sm:$0xf] %v468
      $region48: #{output_projection_forward.1} parent=39 // pred_fallthru
        _
      %s473 = smul.u32 2, %s20
      %p474 = scmp.lt.s32.totalorder %s473, 3
      %s475 = scalar_select %p474, %s473, 3
      %s476 = smul.addr %s475, 4
      %s477 = scalar_lea.vmem %s5, %s476
      // Predicated region
      $region49: #{output_projection_forward.1} parent=39 // pred_check
        %p478 = pneg %p161
      $region50: #{output_projection_forward.1} parent=39 // pred_check_branch
        %480 = sbr.rel (%p478) target = $region52
      $region51: #{output_projection_forward.1} parent=39 // pred_region
        %s481 = smul.u32 2, %s20
      $region52: #{output_projection_forward.1} parent=39 // pred_fallthru
        _
    $region40: #{output_projection_forward.1} parent=5 // pred_fallthru
      _
    %p482 = scmp.le.s32.totalorder 2, %s11
    // Predicated region
    $region53: #{output_projection_forward.1} parent=5 // pred_check
      %p483 = pneg %p482
    $region54: #{output_projection_forward.1} parent=5 // pred_check_branch
      %485 = sbr.rel (%p483) target = $region56
    $region55: #{output_projection_forward.1} parent=5 // pred_region
      %s486 = ssub.s32 %s11, 2
      // Predicated region
      $region57: #{output_projection_forward.1} parent=55 // pred_check
        %p487 = pneg %p167
      $region58: #{output_projection_forward.1} parent=55 // pred_check_branch
        %489 = sbr.rel (%p487) target = $region60
      $region59: #{output_projection_forward.1} parent=55 // pred_region
        %s490 = smul.u32 2, %s22
        %p491 = scmp.lt.s32.totalorder %s490, 3
        %s492 = scalar_select %p491, %s490, 3
        %s493 = smul.addr %s492, 4
        %s494 = scalar_lea.vmem %s5, %s493
      $region60: #{output_projection_forward.1} parent=55 // pred_fallthru
        _
    $region56: #{output_projection_forward.1} parent=5 // pred_fallthru
      _
  $region6: #{output_projection_forward.1} parent=0 // loop_footer
    %s15 = sadd.s32 1, %s11
  $region7: #{output_projection_forward.1} parent=0 // loop_footer_branch
    %10 = sbr.rel target = $region3
  $region8: #{output_projection_forward.1} parent=0 // loop_exit
    _

</llo_original>
